<compile_context>
chip_gen: v6e
topology: v6e:2x2x1
jax: 0.10.0
libtpu: 0.0.40
codegen_flags: <defaults>
</compile_context>

<pallas_src>
import jax
import jax.numpy as jnp
from jax.experimental import pallas as pl
from jax.experimental.pallas import tpu as pltpu


# ----------------------------------------------------------------------------
# Kernels
# ----------------------------------------------------------------------------
def highway_fullk_kernel(xmm_ref, xres_ref, w_ref, b_ref, o_ref):
    """Full-reduction step: one (tm, Dp) x (Dp, 2*tn) matmul + fused epilogue."""
    tn = o_ref.shape[1]
    lhs = xmm_ref[...].astype(jnp.bfloat16)          # no-op if already bf16
    acc = jnp.dot(lhs, w_ref[...], preferred_element_type=jnp.float32)
    acc = acc + b_ref[...]                           # f32 bias add
    proj = jnp.maximum(acc[:, :tn], 0.0)             # relu(x @ Wp + bp)
    # sigmoid = 1 / (1 + exp(-t)); exp + approx reciprocal live on the EUP.
    gate = pl.reciprocal(1.0 + jnp.exp(-acc[:, tn:]), approx=True)
    xr = xres_ref[...]                               # exact f32 residual
    # gate*proj + (1-gate)*x  ==  x + gate*(proj - x)   (fewer VPU ops)
    o_ref[...] = (xr + gate * (proj - xr)).astype(o_ref.dtype)


def highway_kchunk_kernel(xmm_ref, xres_ref, w_ref, b_ref, o_ref, acc_ref):
    """Fallback for very large D: K-chunked reduction with an f32 accumulator."""
    k = pl.program_id(2)

    @pl.when(k == 0)
    def _():
        # Fold the bias add into the accumulator init (biases are f32).
        acc_ref[...] = jnp.broadcast_to(b_ref[...], acc_ref.shape)

    acc_ref[...] += jnp.dot(xmm_ref[...].astype(jnp.bfloat16), w_ref[...],
                            preferred_element_type=jnp.float32)

    @pl.when(k == pl.num_programs(2) - 1)
    def _():
        tn = o_ref.shape[1]
        acc = acc_ref[...]                            # (tm, 2*tn) f32
        proj = jnp.maximum(acc[:, :tn], 0.0)
        gate = pl.reciprocal(1.0 + jnp.exp(-acc[:, tn:]), approx=True)
        xr = xres_ref[...]
        o_ref[...] = (xr + gate * (proj - xr)).astype(o_ref.dtype)


# ----------------------------------------------------------------------------
# Wrapper
# ----------------------------------------------------------------------------
_TM_CANDIDATES = (1024, 512, 384, 256, 128, 64, 32, 16, 8)
_TN_CANDIDATES = (512, 256, 128)


def _round_up(n, m):
    return (n + m - 1) // m * m


def _vmem_budget_bytes():
    """Per-generation VMEM budget: leave headroom on v7x's 64 MiB/TC, use the
    larger 128 MiB on v5e/v6e."""
    try:
        cap = int(pltpu.get_tpu_info().vmem_capacity_bytes)
    except Exception:
        cap = 64 * 1024 * 1024
    if cap >= 100 * 1024 * 1024:
        return 96 * 1024 * 1024
    return 44 * 1024 * 1024


def _fuse_weights(wp, wt, bp, bt, Dp, tile):
    """Interleave proj/transform weights per `tile`-wide output block."""
    nj = Dp // tile
    w_cat = jnp.stack([wp.reshape(Dp, nj, tile), wt.reshape(Dp, nj, tile)], axis=2)
    w_cat = w_cat.reshape(Dp, 2 * Dp).astype(jnp.bfloat16)   # bf16 weights in HBM
    b_cat = jnp.stack([bp.reshape(1, nj, tile), bt.reshape(1, nj, tile)], axis=2)
    b_cat = b_cat.reshape(1, 2 * Dp)                          # biases stay f32
    return w_cat, b_cat, nj


def highway(x, w_proj, b_proj, w_transform, b_transform):
    """Highway forward.  x: (B, D) f32; w_*: (D, D) stored (in, out); b_*: (1, D)."""
    B, D = x.shape
    b_proj = b_proj.reshape(1, D).astype(jnp.float32)
    b_transform = b_transform.reshape(1, D).astype(jnp.float32)
    x = x.astype(jnp.float32)

    budget = _vmem_budget_bytes()

    # ---- padded shapes: lane dim multiple of 128 (multiple of 256 when D>128
    # ---- so the N tile never underfills the 2x256 MXU on v6e/v7x). ----------
    Dp = _round_up(D, 128)
    if Dp > 128 and Dp % 256 != 0:
        Dp = _round_up(D, 256)
    Bp = _round_up(B, 8)

    aligned = (B == Bp) and (D == Dp)
    if aligned:
        # Fast path: no zero-pad copies.
        x_p, wp, wt, bp, bt = x, w_proj, w_transform, b_proj, b_transform
    else:
        x_p = jnp.zeros((Bp, Dp), jnp.float32).at[:B, :D].set(x)
        wp = jnp.zeros((Dp, Dp), jnp.float32).at[:D, :D].set(w_proj)
        wt = jnp.zeros((Dp, Dp), jnp.float32).at[:D, :D].set(w_transform)
        bp = jnp.zeros((1, Dp), jnp.float32).at[:, :D].set(b_proj)
        bt = jnp.zeros((1, Dp), jnp.float32).at[:, :D].set(b_transform)

    # ---- N tile: largest candidate dividing Dp whose (double-buffered) bf16
    # ---- weight slab fits in at most half the VMEM budget. -----------------
    tn = None
    for c in _TN_CANDIDATES:
        if Dp % c == 0 and 2 * (Dp * 2 * c * 2) <= budget // 2:
            tn = c
            break

    if tn is not None:
        # --------------------------- full-K path ----------------------------
        w_cat, b_cat, nj = _fuse_weights(wp, wt, bp, bt, Dp, tn)
        # For few N tiles keep a single f32 x array (cast to bf16 in-kernel);
        # for many N tiles a pre-cast bf16 copy halves the repeated x stream.
        x_mm = x_p if nj <= 2 else x_p.astype(jnp.bfloat16)
        xmm_bytes = jnp.dtype(x_mm.dtype).itemsize

        w_vmem = 2 * (Dp * 2 * tn * 2) + 2 * (2 * tn * 4)
        tm = 8
        for c in _TM_CANDIDATES:
            if Bp % c != 0:
                continue
            use = (2 * c * Dp * xmm_bytes    # x (matmul lhs), double-buffered
                   + 2 * c * tn * 4          # x (residual)
                   + 2 * c * tn * 4          # output
                   + w_vmem)                 # resident fused weight slab + bias
            if use <= budget:
                tm = c
                break

        # Grid is (N, M) with M innermost: the weight slab index depends only
        # on j, so it is DMA'd once per N column and reused for every M tile.
        grid = (Dp // tn, Bp // tm)

        out_p = pl.pallas_call(
            highway_fullk_kernel,
            out_shape=jax.ShapeDtypeStruct((Bp, Dp), jnp.float32),
            grid_spec=pltpu.PrefetchScalarGridSpec(
                num_scalar_prefetch=0,
                grid=grid,
                in_specs=[
                    pl.BlockSpec((tm, Dp), lambda j, i: (i, 0)),      # x, full K row
                    pl.BlockSpec((tm, tn), lambda j, i: (i, j)),      # x residual (f32)
                    pl.BlockSpec((Dp, 2 * tn), lambda j, i: (0, j)),  # fused weights (bf16)
                    pl.BlockSpec((1, 2 * tn), lambda j, i: (0, j)),   # fused biases (f32)
                ],
                out_specs=pl.BlockSpec((tm, tn), lambda j, i: (i, j)),
            ),
            compiler_params=pltpu.CompilerParams(
                dimension_semantics=("parallel", "parallel"),
                vmem_limit_bytes=budget,
            ),
        )(x_mm, x_p, w_cat, b_cat)
    else:
        # ----------------- K-chunked fallback (very large D) ----------------
        td = 128
        for c in _TN_CANDIDATES:
            if Dp % c == 0:
                td = c
                break
        w_cat, b_cat, _ = _fuse_weights(wp, wt, bp, bt, Dp, td)
        x_mm = x_p.astype(jnp.bfloat16)

        tm = 8
        for c in _TM_CANDIDATES:
            if Bp % c != 0:
                continue
            use = (2 * c * td * 2           # x_mm block
                   + 2 * c * td * 4         # x residual block
                   + 2 * td * 2 * td * 2    # fused weight block
                   + 2 * c * td * 4         # output block
                   + c * 2 * td * 4)        # f32 accumulator scratch
            if use <= budget:
                tm = c
                break

        grid = (Bp // tm, Dp // td, Dp // td)   # (M, N, K) — reduction last

        out_p = pl.pallas_call(
            highway_kchunk_kernel,
            out_shape=jax.ShapeDtypeStruct((Bp, Dp), jnp.float32),
            grid_spec=pltpu.PrefetchScalarGridSpec(
                num_scalar_prefetch=0,
                grid=grid,
                in_specs=[
                    pl.BlockSpec((tm, td), lambda i, j, k: (i, k)),      # x (matmul lhs)
                    pl.BlockSpec((tm, td), lambda i, j, k: (i, j)),      # x (residual)
                    pl.BlockSpec((td, 2 * td), lambda i, j, k: (k, j)),  # fused weights
                    pl.BlockSpec((1, 2 * td), lambda i, j, k: (0, j)),   # fused biases
                ],
                out_specs=pl.BlockSpec((tm, td), lambda i, j, k: (i, j)),
                scratch_shapes=[pltpu.VMEM((tm, 2 * td), jnp.float32)],
            ),
            compiler_params=pltpu.CompilerParams(
                dimension_semantics=("parallel", "parallel", "arbitrary"),
                vmem_limit_bytes=budget,
            ),
        )(x_mm, x_p, w_cat, b_cat)

    if aligned:
        return out_p
    return out_p[:B, :D]


# ----------------------------------------------------------------------------
# Reference / init helpers
# ----------------------------------------------------------------------------
def init_highway_params(key, input_size, bias_fill=-2.0):
    """Deterministic init matching nn.Linear defaults (uniform +-1/sqrt(fan_in)),
    with the transform bias filled to `bias_fill` as in the PyTorch module."""
    kp_w, kp_b, kt_w = jax.random.split(key, 3)
    bound = 1.0 / jnp.sqrt(jnp.float32(input_size))
    # PyTorch Linear stores weight as (out, in); we keep the transposed (in, out)
    # layout so the kernel computes x @ W.
    w_proj = jax.random.uniform(kp_w, (input_size, input_size), jnp.float32,
                                -bound, bound)
    b_proj = jax.random.uniform(kp_b, (1, input_size), jnp.float32,
                                -bound, bound)
    w_transform = jax.random.uniform(kt_w, (input_size, input_size), jnp.float32,
                                     -bound, bound)
    b_transform = jnp.full((1, input_size), bias_fill, jnp.float32)
    return w_proj, b_proj, w_transform, b_transform


def highway_ref(x, w_proj, b_proj, w_transform, b_transform):
    proj = jax.nn.relu(x @ w_proj + b_proj)
    gate = jax.nn.sigmoid(x @ w_transform + b_transform)
    return gate * proj + (1.0 - gate) * x


if __name__ == "__main__":
    key = jax.random.PRNGKey(0)
    k_x1, k_p1, k_x2, k_p2, k_x3, k_p3 = jax.random.split(key, 6)

    # bf16 matmul operands + approx-sigmoid -> loosened tolerance vs f32 ref.
    TOL = dict(atol=3e-2, rtol=3e-2)

    # Case 1: small, non-lane-aligned shapes (exercises the padding path).
    B1, D1 = 8, 64
    x1 = jax.random.normal(k_x1, (B1, D1), jnp.float32)
    p1 = init_highway_params(k_p1, D1, bias_fill=-2.0)
    out1 = highway(x1, *p1)
    jax.block_until_ready(out1)
    ref1 = highway_ref(x1, *p1)
    assert out1.shape == (B1, D1)
    assert jnp.allclose(out1, ref1, **TOL), float(jnp.max(jnp.abs(out1 - ref1)))

    # Case 2: D=384 -> padded up to 512 (256-multiple rule), single wide N tile.
    B2, D2 = 16, 384
    x2 = jax.random.normal(k_x2, (B2, D2), jnp.float32)
    p2 = init_highway_params(k_p2, D2, bias_fill=-2.0)
    out2 = highway(x2, *p2)
    jax.block_until_ready(out2)
    ref2 = highway_ref(x2, *p2)
    assert out2.shape == (B2, D2)
    assert jnp.allclose(out2, ref2, **TOL), float(jnp.max(jnp.abs(out2 - ref2)))

    # Case 3: aligned shapes (no-pad fast path), 3 N tiles -> resident weight
    # slab reused across the M sweep and the pre-cast bf16 x path.
    B3, D3 = 64, 768
    x3 = jax.random.normal(k_x3, (B3, D3), jnp.float32)
    p3 = init_highway_params(k_p3, D3, bias_fill=-2.0)
    out3 = highway(x3, *p3)
    jax.block_until_ready(out3)
    ref3 = highway_ref(x3, *p3)
    assert out3.shape == (B3, D3)
    assert jnp.allclose(out3, ref3, **TOL), float(jnp.max(jnp.abs(out3 - ref3)))

    print("KERNEL_OK")
</pallas_src>

<mosaic_0001>
module attributes {stable_mosaic.version = 11 : i64} {
  func.func @highway_fullk_kernel(%arg0: i32, %arg1: i32, %arg2: memref<8x128xf32, #tpu.memory_space<vmem>>, %arg3: memref<8x128xf32, #tpu.memory_space<vmem>>, %arg4: memref<128x256xbf16, #tpu.memory_space<vmem>>, %arg5: memref<1x256xf32, #tpu.memory_space<vmem>>, %arg6: memref<8x128xf32, #tpu.memory_space<vmem>>) attributes {dimension_semantics = [#tpu.dimension_semantics<parallel>, #tpu.dimension_semantics<parallel>], iteration_bounds = array<i64: 1, 1>, scalar_prefetch = 0 : i64, scratch_operands = 0 : i64, tpu.core_type = #tpu.core_type<tc>, window_params = [{transform_indices = @transform_0, window_bounds = array<i64: 8, 128>}, {transform_indices = @transform_1, window_bounds = array<i64: 8, 128>}, {transform_indices = @transform_2, window_bounds = array<i64: 128, 256>}, {transform_indices = @transform_3, window_bounds = array<i64: 1, 256>}, {transform_indices = @transform_4, window_bounds = array<i64: 8, 128>}]} {
    %c0 = arith.constant 0 : index
    %c0_0 = arith.constant 0 : index
    %0 = vector.load %arg2[%c0, %c0_0] : memref<8x128xf32, #tpu.memory_space<vmem>>, vector<8x128xf32>
    %1 = arith.truncf %0 : vector<8x128xf32> to vector<8x128xbf16>
    %c0_1 = arith.constant 0 : index
    %c0_2 = arith.constant 0 : index
    %2 = vector.load %arg4[%c0_1, %c0_2] : memref<128x256xbf16, #tpu.memory_space<vmem>>, vector<128x256xbf16>
    %cst = arith.constant dense<0.000000e+00> : vector<8x256xf32>
    %3 = tpu.matmul %1, %2, %cst {dimension_numbers = #tpu.dot_dimension_numbers<[1], [0], [0], [1], [0, 0, 1, 1], [], []>} : vector<8x128xbf16>, vector<128x256xbf16>, vector<8x256xf32> -> vector<8x256xf32>
    %c0_3 = arith.constant 0 : index
    %c0_4 = arith.constant 0 : index
    %4 = vector.load %arg5[%c0_3, %c0_4] : memref<1x256xf32, #tpu.memory_space<vmem>>, vector<1x256xf32>
    %5 = vector.broadcast %4 : vector<1x256xf32> to vector<8x256xf32>
    %6 = arith.addf %3, %5 : vector<8x256xf32>
    %7 = vector.extract_strided_slice %6 {offsets = [0, 0], sizes = [8, 128], strides = [1, 1]} : vector<8x256xf32> to vector<8x128xf32>
    %cst_5 = arith.constant 0.000000e+00 : f32
    %8 = vector.broadcast %cst_5 : f32 to vector<8x128xf32>
    %9 = arith.maximumf %7, %8 : vector<8x128xf32>
    %10 = vector.extract_strided_slice %6 {offsets = [0, 128], sizes = [8, 128], strides = [1, 1]} : vector<8x256xf32> to vector<8x128xf32>
    %cst_6 = arith.constant 0.000000e+00 : f32
    %11 = vector.broadcast %cst_6 : f32 to vector<8x128xf32>
    %12 = arith.subf %11, %10 : vector<8x128xf32>
    %13 = math.exp %12 : vector<8x128xf32>
    %cst_7 = arith.constant 1.000000e+00 : f32
    %14 = vector.broadcast %cst_7 : f32 to vector<8x128xf32>
    %15 = arith.addf %14, %13 : vector<8x128xf32>
    %16 = tpu.reciprocal %15 {approx = true} : vector<8x128xf32> -> vector<8x128xf32>
    %c0_8 = arith.constant 0 : index
    %c0_9 = arith.constant 0 : index
    %17 = vector.load %arg3[%c0_8, %c0_9] : memref<8x128xf32, #tpu.memory_space<vmem>>, vector<8x128xf32>
    %18 = arith.subf %9, %17 : vector<8x128xf32>
    %19 = arith.mulf %16, %18 : vector<8x128xf32>
    %20 = arith.addf %17, %19 : vector<8x128xf32>
    %c0_10 = arith.constant 0 : index
    %c0_11 = arith.constant 0 : index
    %21 = vector.load %arg6[%c0_10, %c0_11] : memref<8x128xf32, #tpu.memory_space<vmem>>, vector<8x128xf32>
    tpu.vector_store %arg6[%c0_10, %c0_11], %20 {strides = array<i32>} : memref<8x128xf32, #tpu.memory_space<vmem>>, vector<8x128xf32>,
    return
  }
  func.func @transform_0(%arg0: i32, %arg1: i32) -> (i32, i32) {
    %c0_i32 = arith.constant 0 : i32
    %c0_i32_0 = arith.constant 0 : i32
    return %arg1, %c0_i32 : i32, i32
  }
  func.func @transform_1(%arg0: i32, %arg1: i32) -> (i32, i32) {
    %c0_i32 = arith.constant 0 : i32
    return %arg1, %arg0 : i32, i32
  }
  func.func @transform_2(%arg0: i32, %arg1: i32) -> (i32, i32) {
    %c0_i32 = arith.constant 0 : i32
    %c0_i32_0 = arith.constant 0 : i32
    return %c0_i32, %arg0 : i32, i32
  }
  func.func @transform_3(%arg0: i32, %arg1: i32) -> (i32, i32) {
    %c0_i32 = arith.constant 0 : i32
    %c0_i32_0 = arith.constant 0 : i32
    return %c0_i32, %arg0 : i32, i32
  }
  func.func @transform_4(%arg0: i32, %arg1: i32) -> (i32, i32) {
    %c0_i32 = arith.constant 0 : i32
    return %arg1, %arg0 : i32, i32
  }
}

</mosaic_0001>

<llo_original>
// kernel: tpu_custom_call.1
$region0: #{tpu_custom_call.1}
  #allocation0 [shape = 'u32[]', space=smem, size = 0x4, offset = 0x4, fixed_abs, tag = 'smem constant byte address 0x4 - core index']
  #allocation1 [shape = 'u32[144,128]{1,0:T(1,128)}', space=vmem, size = 0x12000, scoped, tag = 'internal scratch']
  %s0 = inlined_call_operand.hbm [shape: f32[8,128], index: 0, kind: input, shape index: {}]
  %s1 = inlined_call_operand.hbm [shape: f32[8,128], index: 1, kind: input, shape index: {}]
  %s2 = inlined_call_operand.hbm [shape: bf16[128,256], index: 2, kind: input, shape index: {}]
  %s3 = inlined_call_operand.vmem [shape: f32[1,256], index: 3, kind: input, shape index: {}]
  %s4 = inlined_call_operand.hbm [shape: f32[8,128], index: 4, kind: output, shape index: {}]
  %s5 = sld [smem:[#allocation0]]
  $region38: #{tpu_custom_call.1} parent=0
    _
  %s7 = ssub.s32 1, %s5
  %s8 = scalar_select 0, %s7, %s5
  $region1: #{tpu_custom_call.1} parent=0
    #allocation2 [shape = 'u8[4096]{0}', space=vmem, size = 0x1000, scoped, tag = 'input window, operand 0, single buffered']
    #allocation3 [shape = 's32[1]{0}', space=sflag, size = 0x4, scoped, tag = 'scoped memory for tpu_custom_call.1']
    #allocation4 [shape = 's32[1]{0}', space=sflag, size = 0x4, scoped, tag = 'scoped memory for tpu_custom_call.1']
    #allocation5 [shape = 'u8[4096]{0}', space=vmem, size = 0x1000, scoped, tag = 'input window, operand 1, single buffered']
    #allocation6 [shape = 's32[1]{0}', space=sflag, size = 0x4, scoped, tag = 'scoped memory for tpu_custom_call.1']
    #allocation7 [shape = 'u8[65536]{0}', space=vmem, size = 0x10000, scoped, tag = 'input window, operand 2, single buffered']
    #allocation8 [shape = 'u8[4096]{0}', space=vmem, size = 0x1000, scoped, tag = 'output window, operand 0, single buffered']
    %9 = vsyncpa [#allocation3], 0
    %10 = vsyncpa [#allocation6], 0
    %11 = vsyncpa [#allocation4], 0
    // Predicated region
    $region2: #{tpu_custom_call.1} parent=1 // pred_check
      _
    $region3: #{tpu_custom_call.1} parent=1 // pred_check_branch
      %13 = sbr.rel (0) target = $region5
    $region4: #{tpu_custom_call.1} parent=1 // pred_region
      %s15 = ssub.s32 128, 128
      %16 = vsyncadd [#allocation3], %s15
      %s18 = sshll.u32 [#allocation2], 4
      %s19 = int_to_ptr.vmem [resolvable:$true] %s18
      %21 = dma.hbm_to_vmem [thread:$0]  %s0, 128, %s19, [#allocation3]
    $region5: #{tpu_custom_call.1} parent=1 // pred_fallthru
      _
    // Predicated region
    $region6: #{tpu_custom_call.1} parent=1 // pred_check
      _
    $region7: #{tpu_custom_call.1} parent=1 // pred_check_branch
      %23 = sbr.rel (0) target = $region9
    $region8: #{tpu_custom_call.1} parent=1 // pred_region
      %s25 = ssub.s32 128, 128
      %26 = vsyncadd [#allocation6], %s25
      %s28 = sshll.u32 [#allocation5], 4
      %s29 = int_to_ptr.vmem [resolvable:$true] %s28
      %31 = dma.hbm_to_vmem [thread:$0]  %s1, 128, %s29, [#allocation6]
    $region9: #{tpu_custom_call.1} parent=1 // pred_fallthru
      _
    // Predicated region
    $region10: #{tpu_custom_call.1} parent=1 // pred_check
      _
    $region11: #{tpu_custom_call.1} parent=1 // pred_check_branch
      %33 = sbr.rel (0) target = $region13
    $region12: #{tpu_custom_call.1} parent=1 // pred_region
      %s35 = ssub.s32 2048, 2048
      %36 = vsyncadd [#allocation6], %s35
      %s37 = sshll.u32 [#allocation7], 4
      %s38 = int_to_ptr.vmem [resolvable:$true] %s37
      %43 = dma.hbm_to_vmem [thread:$0]  %s2, 2048, %s38, [#allocation6], 128, 128, 8
    $region13: #{tpu_custom_call.1} parent=1 // pred_fallthru
      _
    // Predicated region
    $region14: #{tpu_custom_call.1} parent=1 // pred_check
      _
    $region15: #{tpu_custom_call.1} parent=1 // pred_check_branch
      %45 = sbr.rel (0) target = $region17
    $region16: #{tpu_custom_call.1} parent=1 // pred_region
      _
    $region17: #{tpu_custom_call.1} parent=1 // pred_fallthru
      _
    // Predicated region
    $region18: #{tpu_custom_call.1} parent=1 // pred_check
      _
    $region19: #{tpu_custom_call.1} parent=1 // pred_check_branch
      %47 = sbr.rel (0) target = $region21
    $region20: #{tpu_custom_call.1} parent=1 // pred_region
      %48 = dma.done [#allocation3], 128
    $region21: #{tpu_custom_call.1} parent=1 // pred_fallthru
      _
    // Predicated region
    $region22: #{tpu_custom_call.1} parent=1 // pred_check
      _
    $region23: #{tpu_custom_call.1} parent=1 // pred_check_branch
      %50 = sbr.rel (0) target = $region25
    $region24: #{tpu_custom_call.1} parent=1 // pred_region
      %51 = dma.done [#allocation6], 128
    $region25: #{tpu_custom_call.1} parent=1 // pred_fallthru
      _
    // Predicated region
    $region26: #{tpu_custom_call.1} parent=1 // pred_check
      _
    $region27: #{tpu_custom_call.1} parent=1 // pred_check_branch
      %53 = sbr.rel (0) target = $region29
    $region28: #{tpu_custom_call.1} parent=1 // pred_region
      %54 = dma.done [#allocation6], 2048
    $region29: #{tpu_custom_call.1} parent=1 // pred_fallthru
      _
    %v56 = vld [vmem:[#allocation2] sm:$0xff]
    %v57 = vpack.c.bf16 %v56, %v56
    %v58 = vld [vmem:[#allocation7] sm:$0xff]
    %v59 = vld [vmem:[#allocation7 + $0x8] sm:$0xff]
    %v60 = vld [vmem:[#allocation7 + $0x10] sm:$0xff]
    %v61 = vld [vmem:[#allocation7 + $0x18] sm:$0xff]
    %v62 = vld [vmem:[#allocation7 + $0x20] sm:$0xff]
    %v63 = vld [vmem:[#allocation7 + $0x28] sm:$0xff]
    %v64 = vld [vmem:[#allocation7 + $0x30] sm:$0xff]
    %v65 = vld [vmem:[#allocation7 + $0x38] sm:$0xff]
    %v66 = vld [vmem:[#allocation7 + $0x40] sm:$0xff]
    %v67 = vld [vmem:[#allocation7 + $0x48] sm:$0xff]
    %v68 = vld [vmem:[#allocation7 + $0x50] sm:$0xff]
    %v69 = vld [vmem:[#allocation7 + $0x58] sm:$0xff]
    %v70 = vld [vmem:[#allocation7 + $0x60] sm:$0xff]
    %v71 = vld [vmem:[#allocation7 + $0x68] sm:$0xff]
    %v72 = vld [vmem:[#allocation7 + $0x70] sm:$0xff]
    %v73 = vld [vmem:[#allocation7 + $0x78] sm:$0xff]
    %v74 = vld [vmem:[%s3] sm:$0x3]
    %v76 = vlaneseq
    %v77 = vshrl.u32 %v76, 7
    %v78 = vsub.s32 0, %v77
    %v79 = vrot.slane %v74, %v78
    %v80 = vlaneseq
    %v81 = vshrl.u32 %v80, 7
    %v82 = vsub.s32 1, %v81
    %v83 = vrot.slane %v74, %v82
    %v102 = vunpack.c.l.b16 %v58
    %v103 = vunpack.c.h.b16 %v58
    %v104 = vunpack.c.l.b16 %v59
    %v105 = vunpack.c.h.b16 %v59
    %v106 = vunpack.c.l.b16 %v60
    %v107 = vunpack.c.h.b16 %v60
    %v108 = vunpack.c.l.b16 %v61
    %v109 = vunpack.c.h.b16 %v61
    %v110 = vunpack.c.l.b16 %v62
    %v111 = vunpack.c.h.b16 %v62
    %v112 = vunpack.c.l.b16 %v63
    %v113 = vunpack.c.h.b16 %v63
    %v114 = vunpack.c.l.b16 %v64
    %v115 = vunpack.c.h.b16 %v64
    %v116 = vunpack.c.l.b16 %v65
    %v117 = vunpack.c.h.b16 %v65
    %v118 = vunpack.c.l.b16 %v66
    %v119 = vunpack.c.h.b16 %v66
    %v120 = vunpack.c.l.b16 %v67
    %v121 = vunpack.c.h.b16 %v67
    %v122 = vunpack.c.l.b16 %v68
    %v123 = vunpack.c.h.b16 %v68
    %v124 = vunpack.c.l.b16 %v69
    %v125 = vunpack.c.h.b16 %v69
    %v126 = vunpack.c.l.b16 %v70
    %v127 = vunpack.c.h.b16 %v70
    %v128 = vunpack.c.l.b16 %v71
    %v129 = vunpack.c.h.b16 %v71
    %v130 = vunpack.c.l.b16 %v72
    %v131 = vunpack.c.h.b16 %v72
    %v132 = vunpack.c.l.b16 %v73
    %v133 = vunpack.c.h.b16 %v73
    %v134 = vpack.c.b16 %v104, %v102
    %v135 = vpack.c.b16 %v105, %v103
    %v136 = vpack.c.b16 %v108, %v106
    %v137 = vpack.c.b16 %v109, %v107
    %v138 = vpack.c.b16 %v112, %v110
    %v139 = vpack.c.b16 %v113, %v111
    %v140 = vpack.c.b16 %v116, %v114
    %v141 = vpack.c.b16 %v117, %v115
    %v142 = vpack.c.b16 %v120, %v118
    %v143 = vpack.c.b16 %v121, %v119
    %v144 = vpack.c.b16 %v124, %v122
    %v145 = vpack.c.b16 %v125, %v123
    %v146 = vpack.c.b16 %v128, %v126
    %v147 = vpack.c.b16 %v129, %v127
    %v148 = vpack.c.b16 %v132, %v130
    %v149 = vpack.c.b16 %v133, %v131
    %166 = vmatprep.subr.bf16.mxu0 %v149
    %167 = vmatpush1.bf16.msra.mxu0 %v148
    %168 = vmatprep.subr.bf16.mxu0 %v147
    %169 = vmatpush1.bf16.msra.mxu0 %v146
    %170 = vmatprep.subr.bf16.mxu0 %v145
    %171 = vmatpush1.bf16.msra.mxu0 %v144
    %172 = vmatprep.subr.bf16.mxu0 %v143
    %173 = vmatpush1.bf16.msra.mxu0 %v142
    %174 = vmatprep.subr.bf16.mxu0 %v141
    %175 = vmatpush1.bf16.msra.mxu0 %v140
    %176 = vmatprep.subr.bf16.mxu0 %v139
    %177 = vmatpush1.bf16.msra.mxu0 %v138
    %178 = vmatprep.subr.bf16.mxu0 %v137
    %179 = vmatpush1.bf16.msra.mxu0 %v136
    %180 = vmatprep.subr.bf16.mxu0 %v135
    %181 = vmatpush1.bf16.msra.mxu0 %v134
    %182 = vmatprep.subr.bf16.mxu0 0
    %183 = vmatpush2.bf16.msra.mxu0 0
    %184 = vmatprep.subr.bf16.mxu0 0
    %185 = vmatpush2.bf16.msra.mxu0 0
    %186 = vmatprep.subr.bf16.mxu0 0
    %187 = vmatpush2.bf16.msra.mxu0 0
    %188 = vmatprep.subr.bf16.mxu0 0
    %189 = vmatpush2.bf16.msra.mxu0 0
    %190 = vmatprep.subr.bf16.mxu0 0
    %191 = vmatpush2.bf16.msra.mxu0 0
    %192 = vmatprep.subr.bf16.mxu0 0
    %193 = vmatpush2.bf16.msra.mxu0 0
    %194 = vmatprep.subr.bf16.mxu0 0
    %195 = vmatpush2.bf16.msra.mxu0 0
    %196 = vmatprep.subr.bf16.mxu0 0
    %197 = vmatpush2.bf16.msra.mxu0 0
    %198 = vmatprep.mubr.bf16.mxu0 0
    %199 = vmatmul.mubr.bf16.gmra.mxu0 %v57
    %v200 = vpop.f32.mrf.mxu0
    %v201 = vadd.f32 %v79, %v200
    %v202 = vpop.f32.mrf.mxu0
    %v203 = vadd.f32 %v83, %v202
    %v204 = vpop.f32.mrf.mxu0
    %v205 = vpop.f32.mrf.mxu0
    %206 = vdwg.mxu0
    %v207 = vmax.f32 %v201, 0.0
    %v208 = vsub.f32 0.0, %v203
    %v209 = vmul.f32 %v208, 1.442695
    %v210 = vpow.pop %v209
    %v211 = vadd.f32 %v210, 1.0
    %v212 = vrcp.pop %v211
    %v213 = vld [vmem:[#allocation5] sm:$0xff]
    %v214 = vsub.f32 %v207, %v213
    %v215 = vmul.f32 %v212, %v214
    %v216 = vadd.f32 %v213, %v215
    %217 = vst [vmem:[#allocation8] sm:$0xff] %v216
    // Predicated region
    $region30: #{tpu_custom_call.1} parent=1 // pred_check
      _
    $region31: #{tpu_custom_call.1} parent=1 // pred_check_branch
      %219 = sbr.rel (0) target = $region33
    $region32: #{tpu_custom_call.1} parent=1 // pred_region
      %s221 = ssub.s32 128, 128
      %222 = vsyncadd [#allocation4], %s221
      %s224 = sshll.u32 [#allocation8], 4
      %s225 = int_to_ptr.vmem [resolvable:$true] %s224
      %227 = dma.vmem_to_hbm [thread:$0]  %s225, 128, %s4, [#allocation4]
    $region33: #{tpu_custom_call.1} parent=1 // pred_fallthru
      _
    // Predicated region
    $region34: #{tpu_custom_call.1} parent=1 // pred_check
      _
    $region35: #{tpu_custom_call.1} parent=1 // pred_check_branch
      %229 = sbr.rel (0) target = $region37
    $region36: #{tpu_custom_call.1} parent=1 // pred_region
      %230 = dma.done [#allocation4], 128
    $region37: #{tpu_custom_call.1} parent=1 // pred_fallthru
      _
    %231 = vsyncpa [#allocation3], 1
    %232 = vsyncpa [#allocation6], 1
    %233 = vsyncpa [#allocation4], 1

</llo_original>
